<compile_context>
chip_gen: v7x
topology: tpu7x:2x2x1
jax: 0.10.0
libtpu: 0.0.40
codegen_flags: <defaults>
</compile_context>

<pallas_src>
import functools

import jax
import jax.numpy as jnp
from jax import lax
from jax.experimental import pallas as pl
from jax.experimental.pallas import tpu as pltpu


# --------------------------------------------------------------------------
# Hardware / budget helpers
# --------------------------------------------------------------------------


def _round_up(x, m):
    return ((x + m - 1) // m) * m


def _sublane_tile(itemsize):
    # VMEM sublane tile: 8 for f32, 16 for bf16/f16, 32 for int8/fp8.
    return max(8, 32 // max(int(itemsize), 1))


def _vmem_capacity_bytes():
    try:
        return int(pltpu.get_tpu_info().vmem_capacity_bytes)
    except Exception:
        # Conservative fallback (v7x-sized VMEM).
        return 64 * 1024 * 1024


def _num_tensorcores():
    """Best-effort TensorCore-per-chip count (megacore sharding decision)."""
    try:
        info = pltpu.get_tpu_info()
        for attr in ("num_cores", "num_tensorcores", "tensorcore_count",
                     "cores_per_chip", "num_cores_per_chip"):
            v = getattr(info, attr, None)
            if v:
                return int(v)
    except Exception:
        pass
    try:
        kind = jax.devices()[0].device_kind.lower()
        # v5e / v6e ("lite") chips have a single TensorCore.
        if "lite" in kind or "v5e" in kind or "v6e" in kind:
            return 1
    except Exception:
        pass
    # v4 / v5p / v7x style dual-TC chip (splitting is ~free if wrong).
    return 2


def _vmem_budget():
    """(scoped vmem limit to request, byte budget for pipelined blocks)."""
    vmem_cap = _vmem_capacity_bytes()
    # Request half of physical VMEM, capped at 96 MiB:
    #   v5e/v6e: 64 MiB of 128; v7x: 32 MiB of 64.
    vmem_limit = int(min(vmem_cap // 2, 96 * 1024 * 1024))
    # Blocks use half of that; the rest is headroom for the in-kernel f32
    # working copy rounding, vregs and compiler scratch.
    return vmem_limit, vmem_limit // 2


def _single_pass_bytes_per_lane(d0, itemsize):
    """VMEM bytes per lane column for the single-pass kernel (padding aware)."""
    d0_pad_io = _round_up(d0, _sublane_tile(itemsize))   # in/out blocks
    d0_pad_f32 = _round_up(d0, 8)                        # f32 working copy
    # 2x double-buffered input + 2x double-buffered output + 1x f32 temp.
    return d0_pad_io * itemsize * 4 + d0_pad_f32 * 4


# --------------------------------------------------------------------------
# Kernels
# --------------------------------------------------------------------------


def _maxnorm_single_pass_kernel(x_ref, o_ref, *, max_norm_val, eps):
    # One lane-tile of the flattened tensor: shape (D0, tn).  Lanes are
    # independent; padded lanes of a ragged last tile are never written back
    # to valid output memory.
    xf = x_ref[...].astype(jnp.float32)
    sq_sum = jnp.sum(xf * xf, axis=0, keepdims=True)          # (1, tn)
    norm = jnp.sqrt(sq_sum)
    denom = jnp.maximum(norm, max_norm_val / 2.0)              # clamp(min=...)
    number = jnp.minimum(denom, max_norm_val)                  # clamp(max=...)
    scale = number / (denom + eps)
    # Reuse the f32 temp for the store (no second x_ref read / cast pass).
    o_ref[...] = (xf * scale).astype(o_ref.dtype)


def _maxnorm_scale_kernel(x_ref, scale_ref, *, max_norm_val, eps, d0, td0):
    # Pass 1 of the two-pass path: accumulate sum-of-squares over d0 chunks
    # into the resident (1, tn) output block, finalize to the scale factor.
    c = pl.program_id(1)

    @pl.when(c == 0)
    def _():
        scale_ref[...] = jnp.zeros_like(scale_ref)

    xf = x_ref[...].astype(jnp.float32)
    # Mask rows past d0 (ragged last d0 chunk reads unspecified data).
    row = lax.broadcasted_iota(jnp.int32, xf.shape, 0) + c * td0
    xf = jnp.where(row < d0, xf, 0.0)
    scale_ref[...] += jnp.sum(xf * xf, axis=0, keepdims=True)

    @pl.when(c == pl.num_programs(1) - 1)
    def _():
        norm = jnp.sqrt(scale_ref[...])
        denom = jnp.maximum(norm, max_norm_val / 2.0)
        number = jnp.minimum(denom, max_norm_val)
        scale_ref[...] = number / (denom + eps)


def _maxnorm_apply_kernel(x_ref, scale_ref, o_ref):
    # Pass 2: re-stream X and apply the precomputed per-lane scale.
    o_ref[...] = (x_ref[...].astype(jnp.float32) * scale_ref[...]).astype(o_ref.dtype)


# --------------------------------------------------------------------------
# Wrappers
# --------------------------------------------------------------------------


def _max_norm_single_pass(x2d, max_norm_val, eps, block_budget, vmem_limit,
                          bytes_per_lane):
    d0, feat = x2d.shape
    num_tc = _num_tensorcores()

    if feat <= 128:
        # Single full-width block (block last-dim == full array dim is legal).
        tn = feat
        grid = (1,)
    else:
        n_cols = pl.cdiv(feat, 128)
        # Lane width straight from the VMEM byte budget (no artificial lane
        # cap): for typical small d0 this lands blocks in the 2-8 MB range,
        # keeping the ~0.35 us grid-step overhead well under 10%.
        max_lanes = max(128, (block_budget // max(bytes_per_lane, 1)) // 128 * 128)
        tn = min(max_lanes, 128 * n_cols)
        if num_tc >= 2 and n_cols >= 2:
            # Keep >=2 grid steps so both TensorCores get work on megacore
            # chips; skipped on single-TC v5e/v6e (one big block is cheaper).
            tn = min(tn, 128 * pl.cdiv(n_cols, 2))
        tn = max(tn, 128)
        grid = (pl.cdiv(feat, tn),)

    kernel = functools.partial(
        _maxnorm_single_pass_kernel, max_norm_val=float(max_norm_val),
        eps=float(eps))

    return pl.pallas_call(
        kernel,
        out_shape=jax.ShapeDtypeStruct((d0, feat), x2d.dtype),
        grid_spec=pltpu.PrefetchScalarGridSpec(
            num_scalar_prefetch=0,
            grid=grid,
            in_specs=[pl.BlockSpec((d0, tn), lambda i: (0, i))],
            out_specs=pl.BlockSpec((d0, tn), lambda i: (0, i)),
        ),
        compiler_params=pltpu.CompilerParams(
            dimension_semantics=("parallel",),
            vmem_limit_bytes=vmem_limit,
        ),
    )(x2d)


def _max_norm_two_pass(x2d, max_norm_val, eps, block_budget, vmem_limit,
                       td0_cap=None):
    """d0-tiled two-pass path for shapes whose full-column block won't fit."""
    d0, feat = x2d.shape
    itemsize = jnp.dtype(x2d.dtype).itemsize
    sub = _sublane_tile(itemsize)

    # Lane tile.
    if feat <= 128:
        tn = feat
        n_f = 1
    else:
        n_cols = pl.cdiv(feat, 128)
        tn = min(128 * n_cols, 2048)
        n_f = pl.cdiv(feat, tn)

    # d0 chunk, sized from the (worse) pass-2 residency:
    #   per row: 2x in + 2x out double buffers + f32 temp,
    #   plus the small double-buffered (1, tn) f32 scale block (8-sublane pad).
    row_bytes = tn * (4 * itemsize + 4)
    scale_bytes = 2 * 8 * tn * 4
    td0 = (block_budget - scale_bytes) // max(row_bytes, 1)
    td0 = max(sub, (td0 // sub) * sub)
    # Cap a single block at ~4 MiB: enough to hide per-step overhead, while
    # staying comfortably inside the 32 MiB scoped limit on 64 MiB-VMEM chips.
    cap_rows = max(sub, ((4 * 1024 * 1024) // max(tn * itemsize, 1)) // sub * sub)
    td0 = min(td0, cap_rows, _round_up(d0, sub))
    if td0_cap is not None:
        td0 = max(sub, min(td0, (int(td0_cap) // sub) * sub))
    n_c = pl.cdiv(d0, td0)

    # Pass 1: per-lane scale factors (f32, shape (1, feat)).
    scale_kernel = functools.partial(
        _maxnorm_scale_kernel, max_norm_val=float(max_norm_val),
        eps=float(eps), d0=d0, td0=td0)
    scale = pl.pallas_call(
        scale_kernel,
        out_shape=jax.ShapeDtypeStruct((1, feat), jnp.float32),
        grid_spec=pltpu.PrefetchScalarGridSpec(
            num_scalar_prefetch=0,
            grid=(n_f, n_c),  # reduction (d0-chunk) axis last
            in_specs=[pl.BlockSpec((td0, tn), lambda f, c: (c, f))],
            out_specs=pl.BlockSpec((1, tn), lambda f, c: (0, f)),
        ),
        compiler_params=pltpu.CompilerParams(
            dimension_semantics=("parallel", "arbitrary"),
            vmem_limit_bytes=vmem_limit,
        ),
    )(x2d)

    # Pass 2: apply the scale (fully parallel grid).
    out2d = pl.pallas_call(
        _maxnorm_apply_kernel,
        out_shape=jax.ShapeDtypeStruct((d0, feat), x2d.dtype),
        grid_spec=pltpu.PrefetchScalarGridSpec(
            num_scalar_prefetch=0,
            grid=(n_f, n_c),
            in_specs=[pl.BlockSpec((td0, tn), lambda f, c: (c, f)),
                      pl.BlockSpec((1, tn), lambda f, c: (0, f))],
            out_specs=pl.BlockSpec((td0, tn), lambda f, c: (c, f)),
        ),
        compiler_params=pltpu.CompilerParams(
            dimension_semantics=("parallel", "parallel"),
            vmem_limit_bytes=vmem_limit,
        ),
    )(x2d, scale)
    return out2d


def max_norm(x, max_norm_val=2.0, eps=1e-5, force_two_pass=False):
    """Apply MaxNorm forward to tensor x (L2 norm over dim 0)."""
    orig_shape = x.shape
    if x.size == 0:
        return x
    d0 = orig_shape[0]
    feat = 1
    for d in orig_shape[1:]:
        feat *= d
    x2d = x.reshape(d0, feat)

    itemsize = jnp.dtype(x.dtype).itemsize
    vmem_limit, block_budget = _vmem_budget()
    bytes_per_lane = _single_pass_bytes_per_lane(d0, itemsize)
    min_tn = feat if feat <= 128 else 128

    if (not force_two_pass) and bytes_per_lane * min_tn <= block_budget:
        out2d = _max_norm_single_pass(x2d, max_norm_val, eps, block_budget,
                                      vmem_limit, bytes_per_lane)
    else:
        # Large d0 (or forced): residency of a full-column block would exceed
        # the scoped VMEM limit on at least one chip generation.
        out2d = _max_norm_two_pass(x2d, max_norm_val, eps, block_budget,
                                   vmem_limit)
    return out2d.reshape(orig_shape)


# --------------------------------------------------------------------------
# Reference + tests
# --------------------------------------------------------------------------


def _max_norm_ref(x, max_norm_val=2.0, eps=1e-5):
    xf = x.astype(jnp.float32)
    norm = jnp.sqrt(jnp.sum(xf * xf, axis=0, keepdims=True))
    denom = jnp.maximum(norm, max_norm_val / 2.0)
    number = jnp.minimum(denom, max_norm_val)
    return (xf * (number / (denom + eps))).astype(x.dtype)


if __name__ == "__main__":
    key = jax.random.PRNGKey(0)
    k1, k2, k3, k4 = jax.random.split(key, 4)

    # Conv-weight-like tensor (out_ch, in_ch, kh, kw); MaxNorm reduces over dim 0.
    x = jax.random.normal(k1, (16, 4, 1, 64), dtype=jnp.float32) * 1.5
    out = jax.block_until_ready(max_norm(x, max_norm_val=2.0, eps=1e-5))
    ref = _max_norm_ref(x, max_norm_val=2.0, eps=1e-5)
    assert out.shape == x.shape and out.dtype == x.dtype
    assert jnp.allclose(out, ref, atol=1e-5, rtol=1e-5), "mismatch (single-pass)"

    # Non-128-aligned trailing dims exercise the ragged-last-block path.
    y = jax.random.normal(k2, (8, 3, 5, 13), dtype=jnp.float32) * 2.0
    out_y = jax.block_until_ready(max_norm(y, max_norm_val=2.0, eps=1e-5))
    ref_y = _max_norm_ref(y, max_norm_val=2.0, eps=1e-5)
    assert jnp.allclose(out_y, ref_y, atol=1e-5, rtol=1e-5), "mismatch (ragged)"

    # Two-pass path (forced at a small shape, single d0 chunk).
    z = jax.random.normal(k3, (40, 2, 3, 7), dtype=jnp.float32)
    out_z = jax.block_until_ready(max_norm(z, max_norm_val=2.0, eps=1e-5,
                                           force_two_pass=True))
    ref_z = _max_norm_ref(z, max_norm_val=2.0, eps=1e-5)
    assert jnp.allclose(out_z, ref_z, atol=1e-5, rtol=1e-5), "mismatch (two-pass)"

    # Two-pass path with multiple d0 chunks (accumulation + row masking).
    w = jax.random.normal(k4, (40, 2, 3, 7), dtype=jnp.float32) * 0.7
    vmem_limit, block_budget = _vmem_budget()
    out_w = jax.block_until_ready(
        _max_norm_two_pass(w.reshape(40, 42), 2.0, 1e-5, block_budget,
                           vmem_limit, td0_cap=16).reshape(w.shape))
    ref_w = _max_norm_ref(w, max_norm_val=2.0, eps=1e-5)
    assert jnp.allclose(out_w, ref_w, atol=1e-5, rtol=1e-5), "mismatch (chunked)"

    print("KERNEL_OK")
</pallas_src>

<mosaic_0001>
module attributes {stable_mosaic.version = 11 : i64} {
  func.func @_maxnorm_single_pass_kernel(%arg0: i32, %arg1: memref<16x128xf32, #tpu.memory_space<vmem>>, %arg2: memref<16x128xf32, #tpu.memory_space<vmem>>) attributes {dimension_semantics = [#tpu.dimension_semantics<parallel>], iteration_bounds = array<i64: 2>, scalar_prefetch = 0 : i64, scratch_operands = 0 : i64, tpu.core_type = #tpu.core_type<tc>, window_params = [{transform_indices = @transform_0, window_bounds = array<i64: 16, 128>}, {transform_indices = @transform_1, window_bounds = array<i64: 16, 128>}]} {
    %c0 = arith.constant 0 : index
    %c0_0 = arith.constant 0 : index
    %0 = vector.load %arg1[%c0, %c0_0] : memref<16x128xf32, #tpu.memory_space<vmem>>, vector<16x128xf32>
    %1 = arith.mulf %0, %0 : vector<16x128xf32>
    %cst = arith.constant dense<0.000000e+00> : vector<128xf32>
    %2 = vector.multi_reduction <add>, %1, %cst [0] : vector<16x128xf32> to vector<128xf32>
    %3 = vector.shape_cast %2 : vector<128xf32> to vector<1x128xf32>
    %4 = math.sqrt %3 : vector<1x128xf32>
    %cst_1 = arith.constant 1.000000e+00 : f32
    %5 = vector.broadcast %cst_1 : f32 to vector<1x128xf32>
    %6 = arith.maximumf %4, %5 : vector<1x128xf32>
    %cst_2 = arith.constant 2.000000e+00 : f32
    %7 = vector.broadcast %cst_2 : f32 to vector<1x128xf32>
    %8 = arith.minimumf %6, %7 : vector<1x128xf32>
    %cst_3 = arith.constant 9.99999974E-6 : f32
    %9 = vector.broadcast %cst_3 : f32 to vector<1x128xf32>
    %10 = arith.addf %6, %9 : vector<1x128xf32>
    %11 = arith.divf %8, %10 : vector<1x128xf32>
    %12 = vector.broadcast %11 : vector<1x128xf32> to vector<16x128xf32>
    %13 = arith.mulf %0, %12 : vector<16x128xf32>
    %c0_4 = arith.constant 0 : index
    %c0_5 = arith.constant 0 : index
    %14 = vector.load %arg2[%c0_4, %c0_5] : memref<16x128xf32, #tpu.memory_space<vmem>>, vector<16x128xf32>
    tpu.vector_store %arg2[%c0_4, %c0_5], %13 {strides = array<i32>} : memref<16x128xf32, #tpu.memory_space<vmem>>, vector<16x128xf32>,
    return
  }
  func.func @transform_0(%arg0: i32) -> (i32, i32) {
    %c0_i32 = arith.constant 0 : i32
    %c0_i32_0 = arith.constant 0 : i32
    return %c0_i32, %arg0 : i32, i32
  }
  func.func @transform_1(%arg0: i32) -> (i32, i32) {
    %c0_i32 = arith.constant 0 : i32
    %c0_i32_0 = arith.constant 0 : i32
    return %c0_i32, %arg0 : i32, i32
  }
}

</mosaic_0001>

<llo_original>
// kernel: tpu_custom_call.1
$region0: #{tpu_custom_call.1}
  #allocation0 [shape = 'u32[]', space=smem, size = 0x4, offset = 0x4, fixed_abs, tag = 'smem constant byte address 0x4 - core index']
  #allocation1 [shape = 'u32[144,128]{1,0:T(1,128)}', space=vmem, size = 0x12000, scoped, tag = 'internal scratch']
  %s0 = inlined_call_operand.hbm [shape: f32[16,256], index: 0, kind: input, shape index: {}]
  %s1 = inlined_call_operand.hbm [shape: f32[16,256], index: 1, kind: output, shape index: {}]
  %s2 = sld [smem:[#allocation0]]
  $region41: #{tpu_custom_call.1} parent=0
    _
  %s4 = ssub.s32 1, %s2
  %s5 = scalar_select 0, %s4, %s2
  $region1: #{tpu_custom_call.1} parent=0
    #allocation2 [shape = 'u8[16384]{0}', space=vmem, size = 0x4000, scoped, tag = 'input window, operand 0']
    #allocation3 [shape = 's32[2]{0}', space=sflag, size = 0x8, scoped, tag = 'scoped memory for tpu_custom_call.1']
    #allocation4 [shape = 's32[2]{0}', space=sflag, size = 0x8, scoped, tag = 'scoped memory for tpu_custom_call.1']
    #allocation5 [shape = 'u8[16384]{0}', space=vmem, size = 0x4000, scoped, tag = 'output window, operand 0']
    %6 = vsyncpa [#allocation3], 0
    %s7 = scalar_lea.sflag [#allocation3], 1
    %8 = vsyncpa %s7, 0
    %9 = vsyncpa [#allocation4], 0
    %s10 = scalar_lea.sflag [#allocation4], 1
    %11 = vsyncpa %s10, 0
    loop: start=0, step=1, limit=4
    $region2: #{tpu_custom_call.1} parent=1 // loop_pre_header
      _
    $region3: #{tpu_custom_call.1} parent=1 // loop_header
      %s13 = sphi 0, %s17
      %p14 = scmp.ge.s32.totalorder %s13, 4
      %s23 = sphi 0, %s25
      %s26 = sphi 0, %s23
      %s27 = sphi 0, %s26
      %s43 = sphi 0, %s27
      %s49 = sphi 0, %s51
      %s52 = sphi 0, %s49
      %s53 = sphi 0, %s52
      %s69 = sphi 0, %s53
    $region4: #{tpu_custom_call.1} parent=1 // loop_header_branch
      %16 = sbr.rel (%p14) target = $region8
    $region5: #{tpu_custom_call.1} parent=1 // loop_body
      %s18 = ssub.s32 %s13, 1
      %s19 = ssub.s32 %s13, 2
      %s20 = sadd.s32 %s13, 1
      %s21 = ssub.s32 %s13, %s20
      %p22 = scmp.eq.s32.totalorder %s21, 0
      %s24 = sadd.s32 %s23, 1
      %s25 = scalar_select %p22, %s23, %s24
      %p28 = pneg %p22
      %p29 = scmp.eq.s32.totalorder %s13, 1
      %p30 = por %p28, %p29
      %p31 = scmp.ne.s32.totalorder %s23, %s26
      %p32 = scmp.eq.s32.totalorder %s13, 0
      %p33 = por %p31, %p32
      %p34 = scmp.ne.s32.totalorder %s23, %s26
      %p35 = scmp.eq.s32.totalorder %s18, 1
      %p36 = por %p34, %p35
      %p37 = scmp.ne.s32.totalorder %s26, %s27
      %p38 = scmp.eq.s32.totalorder %s18, 0
      %p39 = por %p37, %p38
      %p40 = scmp.ne.s32.totalorder %s26, %s27
      %p41 = scmp.eq.s32.totalorder %s19, 1
      %p42 = por %p40, %p41
      %p44 = scmp.ne.s32.totalorder %s27, %s43
      %p45 = scmp.eq.s32.totalorder %s19, 0
      %p46 = por %p44, %p45
      %s47 = ssub.s32 %s13, %s20
      %p48 = scmp.eq.s32.totalorder %s47, 0
      %s50 = sadd.s32 %s49, 1
      %s51 = scalar_select %p48, %s49, %s50
      %p54 = pneg %p48
      %p55 = scmp.eq.s32.totalorder %s13, 1
      %p56 = por %p54, %p55
      %p57 = scmp.ne.s32.totalorder %s49, %s52
      %p58 = scmp.eq.s32.totalorder %s13, 0
      %p59 = por %p57, %p58
      %p60 = scmp.ne.s32.totalorder %s49, %s52
      %p61 = scmp.eq.s32.totalorder %s18, 1
      %p62 = por %p60, %p61
      %p63 = scmp.ne.s32.totalorder %s52, %s53
      %p64 = scmp.eq.s32.totalorder %s18, 0
      %p65 = por %p63, %p64
      %p66 = scmp.ne.s32.totalorder %s52, %s53
      %p67 = scmp.eq.s32.totalorder %s19, 1
      %p68 = por %p66, %p67
      %p70 = scmp.ne.s32.totalorder %s53, %s69
      %p71 = scmp.eq.s32.totalorder %s19, 0
      %p72 = por %p70, %p71
      %p73 = scmp.le.s32.totalorder 1, %s13
      %p74 = scmp.lt.s32.totalorder %s13, 3
      %p75 = pnand %p73, %p74
      %p76 = pneg %p75
      // Predicated region
      $region9: #{tpu_custom_call.1} parent=5 // pred_check
        _
      $region10: #{tpu_custom_call.1} parent=5 // pred_check_branch
        %78 = sbr.rel (%p75) target = $region12
      $region11: #{tpu_custom_call.1} parent=5 // pred_region
        %s79 = ssub.s32 %s13, 1
      $region12: #{tpu_custom_call.1} parent=5 // pred_fallthru
        _
      %p80 = scmp.lt.s32.totalorder %s13, 2
      // Predicated region
      $region13: #{tpu_custom_call.1} parent=5 // pred_check
        %p81 = pneg %p80
      $region14: #{tpu_custom_call.1} parent=5 // pred_check_branch
        %83 = sbr.rel (%p81) target = $region16
      $region15: #{tpu_custom_call.1} parent=5 // pred_region
        // Predicated region
        $region17: #{tpu_custom_call.1} parent=15 // pred_check
          %p84 = pneg %p33
        $region18: #{tpu_custom_call.1} parent=15 // pred_check_branch
          %86 = sbr.rel (%p84) target = $region20
        $region19: #{tpu_custom_call.1} parent=15 // pred_region
          %s87 = sand.u32 %s23, 1
          %s88 = scalar_lea.sflag [#allocation3], %s87
          %s89 = sand.u32 %s23, 1
          %s90 = smul.addr %s89, 16
          %s91 = scalar_lea.vmem [#allocation2], %s90
          %s93 = ssub.s32 256, 256
          %94 = vsyncadd %s88, %s93
          %s95 = smul.addr %s13, 128
          %s96 = scalar_lea.hbm %s0, %s95
          %s97 = sshll.u32 %s91, 4
          %s98 = int_to_ptr.vmem [resolvable:$true] %s97
          %103 = dma.hbm_to_vmem [thread:$0]  %s96, 256, %s98, %s88, 256, 128, 8
        $region20: #{tpu_custom_call.1} parent=15 // pred_fallthru
          _
      $region16: #{tpu_custom_call.1} parent=5 // pred_fallthru
        _
      %p104 = scmp.le.s32.totalorder 1, %s13
      %p105 = scmp.lt.s32.totalorder %s13, 3
      %p106 = pnand %p104, %p105
      %p107 = pneg %p106
      // Predicated region
      $region21: #{tpu_custom_call.1} parent=5 // pred_check
        _
      $region22: #{tpu_custom_call.1} parent=5 // pred_check_branch
        %109 = sbr.rel (%p106) target = $region24
      $region23: #{tpu_custom_call.1} parent=5 // pred_region
        %s110 = ssub.s32 %s13, 1
        %s111 = sand.u32 %s26, 1
        %s112 = scalar_lea.sflag [#allocation3], %s111
        %s113 = sand.u32 %s26, 1
        %s114 = smul.addr %s113, 16
        %s115 = scalar_lea.vmem [#allocation2], %s114
        // Predicated region
        $region25: #{tpu_custom_call.1} parent=23 // pred_check
          %p116 = pneg %p39
        $region26: #{tpu_custom_call.1} parent=23 // pred_check_branch
          %118 = sbr.rel (%p116) target = $region28
        $region27: #{tpu_custom_call.1} parent=23 // pred_region
          %119 = dma.done %s112, 256
        $region28: #{tpu_custom_call.1} parent=23 // pred_fallthru
          _
        %s120 = sand.u32 %s26, 1
        %s121 = scalar_lea.sflag [#allocation3], %s120
        %s122 = sand.u32 %s26, 1
        %s123 = smul.addr %s122, 16
        %s124 = scalar_lea.vmem [#allocation2], %s123
        %p125 = pneg %p39
        %p126 = pneg %p36
        %p127 = pneg %p65
        %p128 = pneg %p62
        %s129 = sand.u32 %s52, 1
        %s130 = scalar_lea.sflag [#allocation4], %s129
        %s131 = sand.u32 %s52, 1
        %s132 = smul.addr %s131, 16
        %s133 = scalar_lea.vmem [#allocation5], %s132
        %v134 = vld [vmem:[%s115] sm:$0xff]
        %v135 = vld [vmem:[%s115 + $0x8] sm:$0xff]
        %v136 = vmul.f32 %v134, %v134
        %v137 = vmul.f32 %v135, %v135
        %v138 = vadd.f32 %v136, %v137
        %v139 = vrot.slane %v138, 4
        %v140 = vadd.f32 %v138, %v139
        %v141 = vrot.slane %v140, 2
        %v142 = vadd.f32 %v140, %v141
        %v143 = vrot.slane %v142, 1
        %v144 = vadd.f32 %v142, %v143
        %v145 = vrsqrt.pop %v144
        %v146 = vmul.f32 %v144, %v145
        %vm147 = vcmp.eq.f32.partialorder %v144, inf
        %v148 = vsel %vm147, %v144, %v146
        %vm149 = vcmp.eq.f32.partialorder %v144, 0.0
        %v150 = vand.u32 %v144, 2147483648
        %v151 = vsel %vm149, %v150, %v148
        %v152 = vmax.f32 %v151, 1.0
        %v153 = vmin.f32 %v152, 2.0
        %v154 = vadd.f32 %v152, 1e-05
        %v155 = vrcp.pop %v154
        %v156 = vmul.f32 %v153, %v155
        %v157 = vmul.f32 %v134, %v156
        %v158 = vmul.f32 %v135, %v156
        %159 = vst [vmem:[%s133] sm:$0xff] %v157
        %160 = vst [vmem:[%s133 + $0x8] sm:$0xff] %v158
        %s161 = sand.u32 %s52, 1
        %s162 = scalar_lea.sflag [#allocation4], %s161
        %s163 = sand.u32 %s52, 1
        %s164 = smul.addr %s163, 16
        %s165 = scalar_lea.vmem [#allocation5], %s164
        // Predicated region
        $region29: #{tpu_custom_call.1} parent=23 // pred_check
          %p166 = pneg %p62
        $region30: #{tpu_custom_call.1} parent=23 // pred_check_branch
          %168 = sbr.rel (%p166) target = $region32
        $region31: #{tpu_custom_call.1} parent=23 // pred_region
          %s170 = ssub.s32 256, 256
          %171 = vsyncadd %s162, %s170
          %s172 = smul.addr %s18, 128
          %s173 = scalar_lea.hbm %s1, %s172
          %s174 = sshll.u32 %s165, 4
          %s175 = int_to_ptr.vmem [resolvable:$true] %s174
          %180 = dma.vmem_to_hbm [thread:$0]  %s175, 256, %s173, %s162, 128, 256, 8
        $region32: #{tpu_custom_call.1} parent=23 // pred_fallthru
          _
      $region24: #{tpu_custom_call.1} parent=5 // pred_fallthru
        _
      %p181 = scmp.le.s32.totalorder 2, %s13
      // Predicated region
      $region33: #{tpu_custom_call.1} parent=5 // pred_check
        %p182 = pneg %p181
      $region34: #{tpu_custom_call.1} parent=5 // pred_check_branch
        %184 = sbr.rel (%p182) target = $region36
      $region35: #{tpu_custom_call.1} parent=5 // pred_region
        %s185 = ssub.s32 %s13, 2
        // Predicated region
        $region37: #{tpu_custom_call.1} parent=35 // pred_check
          %p186 = pneg %p68
        $region38: #{tpu_custom_call.1} parent=35 // pred_check_branch
          %188 = sbr.rel (%p186) target = $region40
        $region39: #{tpu_custom_call.1} parent=35 // pred_region
          %s189 = sand.u32 %s53, 1
          %s190 = scalar_lea.sflag [#allocation4], %s189
          %s191 = sand.u32 %s53, 1
          %s192 = smul.addr %s191, 16
          %s193 = scalar_lea.vmem [#allocation5], %s192
          %194 = dma.done %s190, 256
        $region40: #{tpu_custom_call.1} parent=35 // pred_fallthru
          _
      $region36: #{tpu_custom_call.1} parent=5 // pred_fallthru
        _
    $region6: #{tpu_custom_call.1} parent=1 // loop_footer
      %s17 = sadd.s32 1, %s13
    $region7: #{tpu_custom_call.1} parent=1 // loop_footer_branch
      %12 = sbr.rel target = $region3
    $region8: #{tpu_custom_call.1} parent=1 // loop_exit
      _
    %195 = vsyncpa [#allocation3], 1
    %s196 = scalar_lea.sflag [#allocation3], 1
    %197 = vsyncpa %s196, 1
    %198 = vsyncpa [#allocation4], 1
    %s199 = scalar_lea.sflag [#allocation4], 1
    %200 = vsyncpa %s199, 1

</llo_original>
